<compile_context>
chip_gen: v5e
topology: v5e:2x2
jax: 0.10.0
libtpu: 0.0.40
codegen_flags: <defaults>
</compile_context>

<pallas_src>
import functools

import jax
import jax.numpy as jnp
from jax import lax
from jax.experimental import pallas as pl
from jax.experimental.pallas import tpu as pltpu


def _round_up(x, m):
    return ((x + m - 1) // m) * m


def _int_power(x, g):
    """x ** g for non-negative integer g via square-and-multiply (VPU muls only)."""
    if g == 0:
        return jnp.ones_like(x)
    result = None
    base = x
    while g:
        if g & 1:
            result = base if result is None else result * base
        g >>= 1
        if g:
            base = base * base
    return result


def _focal_pow(one_minus_p, gamma):
    if float(gamma).is_integer() and 0.0 <= float(gamma) <= 32.0:
        return _int_power(one_minus_p, int(gamma))
    # Non-integer gamma: fall back to pow (exp/log on the EUP).
    return jnp.power(one_minus_p, jnp.float32(gamma))


def _ce_focal_kernel(x_ref, *rest, gamma, n_rows, has_weight, needs_row_mask):
    if has_weight:
        w_ref, out_ref = rest
    else:
        (out_ref,) = rest
        w_ref = None

    x = x_ref[...].astype(jnp.float32)                      # (tile_n, C)
    tile_n, c = x.shape

    # Numerically-stable softmax over the class axis (dim=1 in the reference).
    m = jnp.max(x, axis=1, keepdims=True)
    shifted = x - m
    e = jnp.exp(shifted)
    denom = jnp.sum(e, axis=1, keepdims=True)               # (tile_n, 1)
    inv = pl.reciprocal(denom, approx=False)                # per-row, exact
    probs = e * inv                                         # softmax(inputs, dim=1)
    log_probs = shifted - jnp.log(denom)                    # == log(probs)

    focal = _focal_pow(1.0 - probs, gamma) * log_probs      # (tile_n, C)
    if w_ref is not None:
        focal = w_ref[...].astype(jnp.float32) * focal      # (1, C) broadcast
    focal = -focal

    if needs_row_mask:
        # Only the ragged last tile carries out-of-bounds rows with unspecified
        # data (possibly NaN); a (tile_n, 1) select neutralises them before the
        # axis-0 sum.  Compiled out entirely when N is a multiple of tile_n.
        row_ids = lax.broadcasted_iota(jnp.int32, (tile_n, 1), 0)
        row_valid = (row_ids + pl.program_id(0) * tile_n) < n_rows
        focal = jnp.where(row_valid, focal, 0.0)

    # Per-tile, per-class partial sum -> (1, 1, C) output slab.
    partial = jnp.sum(focal, axis=0, keepdims=True)         # (1, C)
    out_ref[...] = partial.reshape(1, 1, c)


def cross_entropy_label_smooth(inputs, targets, *, num_classes, epsilon, gamma,
                               weight=None, tile_rows=None, interpret=False):
    """JAX/Pallas port of CrossEntropyLabelSmooth.forward.

    NOTE: in the reference forward pass the smoothed one-hot `targets` tensor is
    computed but never consumed by the returned loss, so `targets` / `epsilon`
    have no effect on the value.  They are accepted only for API parity.
    """
    del targets, epsilon  # unused by the reference loss expression (see note above)

    n, c = inputs.shape
    assert c == num_classes

    itemsize = jnp.dtype(inputs.dtype).itemsize

    # ---- Generation-aware VMEM budgeting -------------------------------------
    vmem_capacity = None
    try:
        if hasattr(pltpu, "get_tpu_info"):
            vmem_capacity = int(getattr(pltpu.get_tpu_info(), "vmem_capacity_bytes"))
    except Exception:
        vmem_capacity = None
    if not vmem_capacity:
        vmem_capacity = 64 * 1024 * 1024          # conservative default (v7x-class)

    if vmem_capacity <= 96 * 1024 * 1024:         # v7x: 64 MiB per TensorCore
        total_budget = 20 * 1024 * 1024
        vmem_limit_cap = 40 * 1024 * 1024
        max_rows = 1024
    else:                                         # v5e / v6e: 128 MiB
        total_budget = 48 * 1024 * 1024
        vmem_limit_cap = 96 * 1024 * 1024
        max_rows = 4096 if c <= 1024 else 1024

    # Per-row VMEM: double-buffered input stream (native dtype) plus roughly four
    # tile-sized f32 temporaries the body materializes (f32 cast, e, probal chain).
    per_row_bytes = 2 * c * itemsize + 4 * c * 4

    if tile_rows is None:
        rows = total_budget // max(per_row_bytes, 1)
        tile_rows = max(8, min(max_rows, (rows // 8) * 8))

    if n <= 8:
        # Block equals the full batch dim (legal) — avoids over-read for tiny N.
        tile_n = n
    else:
        tile_n = max(8, _round_up(int(tile_rows), 8))
        tile_n = min(tile_n, _round_up(n, 8))
        # Guarantee >= 2 grid tiles so v7x megacore can split the parallel axis
        # across both TensorCores (neutral cost on single-TC v5e/v6e).
        tile_n = min(tile_n, _round_up(pl.cdiv(n, 2), 8))

    num_tiles = pl.cdiv(n, tile_n)
    needs_row_mask = (n % tile_n) != 0

    has_weight = weight is not None
    operands = [inputs]
    in_specs = [pl.BlockSpec((tile_n, c), lambda i: (i, 0))]   # full-extent class block
    if has_weight:
        w = jnp.asarray(weight, dtype=jnp.float32).reshape(1, c)
        operands.append(w)
        in_specs.append(pl.BlockSpec((1, c), lambda i: (0, 0)))

    kernel = functools.partial(
        _ce_focal_kernel,
        gamma=float(gamma),
        n_rows=n,
        has_weight=has_weight,
        needs_row_mask=needs_row_mask,
    )

    vmem_need = (2 * tile_n * c * itemsize       # double-buffered input stream
                 + 4 * tile_n * c * 4            # in-kernel f32 temporaries
                 + 2 * 1 * c * 4                 # double-buffered output slab
                 + (2 * c * 4 if has_weight else 0))
    vmem_limit = int(min(vmem_limit_cap,
                         max(vmem_need + (4 << 20), 16 * 1024 * 1024)))

    cost = pl.CostEstimate(
        flops=12 * n * c,
        transcendentals=n * c + 2 * n,
        bytes_accessed=n * c * itemsize + num_tiles * c * 4
                       + (c * 4 if has_weight else 0),
    )

    partials = pl.pallas_call(
        kernel,
        out_shape=jax.ShapeDtypeStruct((num_tiles, 1, c), jnp.float32),
        grid_spec=pltpu.PrefetchScalarGridSpec(
            num_scalar_prefetch=0,
            grid=(num_tiles,),
            in_specs=in_specs,
            out_specs=pl.BlockSpec((1, 1, c), lambda i: (i, 0, 0)),
        ),
        compiler_params=pltpu.CompilerParams(
            dimension_semantics=("parallel",),
            vmem_limit_bytes=vmem_limit,
        ),
        cost_estimate=cost,
        interpret=interpret,
    )(*operands)

    # Tiny final cross-lane reduction + single 1/N scale (== .mean(0).sum()).
    return jnp.sum(partials) / jnp.float32(n)


def _reference(inputs, targets, *, num_classes, epsilon, gamma, weight=None):
    """Pure-JAX reference mirroring the PyTorch forward exactly."""
    del targets, epsilon  # the smoothed one-hot target is unused by the torch loss
    x = inputs.astype(jnp.float32)
    probs = jax.nn.softmax(x, axis=1)
    log_probs = jnp.log(probs)
    if weight is None:
        loss = (-jnp.power(1.0 - probs, gamma) * log_probs).mean(0).sum()
    else:
        w = jnp.asarray(weight, jnp.float32).reshape(1, -1)
        loss = (-w * jnp.power(1.0 - probs, gamma) * log_probs).mean(0).sum()
    return loss


if __name__ == "__main__":
    num_classes = 16
    epsilon = 0.1
    gamma = 2.0

    key = jax.random.PRNGKey(0)
    k_x, k_t, k_x2, k_t2 = jax.random.split(key, 4)

    # --- Case 1: small batch, unweighted, f32 -------------------------------
    batch = 8
    inputs = jax.random.normal(k_x, (batch, num_classes), dtype=jnp.float32)
    targets = jax.random.randint(k_t, (batch,), 0, num_classes, dtype=jnp.int32)

    loss = cross_entropy_label_smooth(
        inputs, targets, num_classes=num_classes, epsilon=epsilon, gamma=gamma, weight=None
    )
    loss = jax.block_until_ready(loss)
    ref = _reference(
        inputs, targets, num_classes=num_classes, epsilon=epsilon, gamma=gamma, weight=None
    )
    assert jnp.allclose(loss, ref, rtol=1e-5, atol=1e-5), (loss, ref)

    # --- Case 2: weighted variant (per-class weight stream) -----------------
    w = jnp.linspace(0.5, 1.5, num_classes, dtype=jnp.float32)
    loss_w = cross_entropy_label_smooth(
        inputs, targets, num_classes=num_classes, epsilon=epsilon, gamma=gamma, weight=w
    )
    loss_w = jax.block_until_ready(loss_w)
    ref_w = _reference(
        inputs, targets, num_classes=num_classes, epsilon=epsilon, gamma=gamma, weight=w
    )
    assert jnp.allclose(loss_w, ref_w, rtol=1e-5, atol=1e-5), (loss_w, ref_w)

    # --- Case 3: ragged multi-tile batch + bf16 logits (row mask + itemsize) --
    batch2 = 20
    inputs2 = jax.random.normal(k_x2, (batch2, num_classes), dtype=jnp.float32)
    inputs2_bf16 = inputs2.astype(jnp.bfloat16)
    targets2 = jax.random.randint(k_t2, (batch2,), 0, num_classes, dtype=jnp.int32)

    loss2 = cross_entropy_label_smooth(
        inputs2_bf16, targets2, num_classes=num_classes, epsilon=epsilon, gamma=gamma,
        weight=None, tile_rows=16,   # forces 2 tiles with a ragged last tile
    )
    loss2 = jax.block_until_ready(loss2)
    ref2 = _reference(
        inputs2_bf16, targets2, num_classes=num_classes, epsilon=epsilon, gamma=gamma,
        weight=None,
    )
    assert jnp.allclose(loss2, ref2, rtol=1e-4, atol=1e-4), (loss2, ref2)

    print("KERNEL_OK")
</pallas_src>

<mosaic_0001>
module attributes {stable_mosaic.version = 11 : i64} {
  func.func @_ce_focal_kernel(%arg0: i32, %arg1: memref<8x16xf32, #tpu.memory_space<vmem>>, %arg2: memref<1x1x16xf32, #tpu.memory_space<vmem>>) attributes {dimension_semantics = [#tpu.dimension_semantics<parallel>], iteration_bounds = array<i64: 1>, scalar_prefetch = 0 : i64, scratch_operands = 0 : i64, tpu.core_type = #tpu.core_type<tc>, window_params = [{transform_indices = @transform_0, window_bounds = array<i64: 8, 16>}, {transform_indices = @transform_1, window_bounds = array<i64: 1, 1, 16>}]} {
    %c0 = arith.constant 0 : index
    %c0_0 = arith.constant 0 : index
    %0 = vector.load %arg1[%c0, %c0_0] : memref<8x16xf32, #tpu.memory_space<vmem>>, vector<8x16xf32>
    %cst = arith.constant dense<0xFF800000> : vector<8xf32>
    %1 = vector.multi_reduction <maximumf>, %0, %cst [1] : vector<8x16xf32> to vector<8xf32>
    %2 = vector.shape_cast %1 : vector<8xf32> to vector<8x1xf32>
    %3 = vector.broadcast %2 : vector<8x1xf32> to vector<8x16xf32>
    %4 = arith.subf %0, %3 : vector<8x16xf32>
    %5 = math.exp %4 : vector<8x16xf32>
    %cst_1 = arith.constant dense<0.000000e+00> : vector<8xf32>
    %6 = vector.multi_reduction <add>, %5, %cst_1 [1] : vector<8x16xf32> to vector<8xf32>
    %7 = vector.shape_cast %6 : vector<8xf32> to vector<8x1xf32>
    %8 = tpu.reciprocal %7 : vector<8x1xf32> -> vector<8x1xf32>
    %9 = vector.broadcast %8 : vector<8x1xf32> to vector<8x16xf32>
    %10 = arith.mulf %5, %9 : vector<8x16xf32>
    %11 = math.log %7 : vector<8x1xf32>
    %12 = vector.broadcast %11 : vector<8x1xf32> to vector<8x16xf32>
    %13 = arith.subf %4, %12 : vector<8x16xf32>
    %cst_2 = arith.constant 1.000000e+00 : f32
    %14 = vector.broadcast %cst_2 : f32 to vector<8x16xf32>
    %15 = arith.subf %14, %10 : vector<8x16xf32>
    %16 = arith.mulf %15, %15 : vector<8x16xf32>
    %17 = arith.mulf %16, %13 : vector<8x16xf32>
    %cst_3 = arith.constant 0.000000e+00 : f32
    %18 = vector.broadcast %cst_3 : f32 to vector<8x16xf32>
    %19 = arith.subf %18, %17 : vector<8x16xf32>
    %cst_4 = arith.constant dense<0.000000e+00> : vector<16xf32>
    %20 = vector.multi_reduction <add>, %19, %cst_4 [0] : vector<8x16xf32> to vector<16xf32>
    %21 = vector.shape_cast %20 : vector<16xf32> to vector<1x16xf32>
    %22 = vector.shape_cast %21 : vector<1x16xf32> to vector<1x1x16xf32>
    %c0_5 = arith.constant 0 : index
    %c0_6 = arith.constant 0 : index
    %c0_7 = arith.constant 0 : index
    %23 = vector.load %arg2[%c0_5, %c0_6, %c0_7] : memref<1x1x16xf32, #tpu.memory_space<vmem>>, vector<1x1x16xf32>
    tpu.vector_store %arg2[%c0_5, %c0_6, %c0_7], %22 {strides = array<i32>} : memref<1x1x16xf32, #tpu.memory_space<vmem>>, vector<1x1x16xf32>,
    return
  }
  func.func @transform_0(%arg0: i32) -> (i32, i32) {
    %c0_i32 = arith.constant 0 : i32
    %c0_i32_0 = arith.constant 0 : i32
    return %arg0, %c0_i32 : i32, i32
  }
  func.func @transform_1(%arg0: i32) -> (i32, i32, i32) {
    %c0_i32 = arith.constant 0 : i32
    %c0_i32_0 = arith.constant 0 : i32
    %c0_i32_1 = arith.constant 0 : i32
    return %arg0, %c0_i32, %c0_i32_0 : i32, i32, i32
  }
}

</mosaic_0001>

<llo_original>
// kernel: tpu_custom_call.1
$region0: #{tpu_custom_call.1}
  #allocation0 [shape = 'u32[]', space=smem, size = 0x4, offset = 0x4, fixed_abs, tag = 'smem constant byte address 0x4 - core index']
  #allocation1 [shape = 'u32[72,128]{1,0:T(1,128)}', space=vmem, size = 0x9000, scoped, tag = 'internal scratch']
  %s0 = inlined_call_operand.hbm [shape: f32[8,16], index: 0, kind: input, shape index: {}]
  %s1 = inlined_call_operand.hbm [shape: f32[1,1,16], index: 1, kind: output, shape index: {}]
  %s2 = sld [smem:[#allocation0]]
  $region18: #{tpu_custom_call.1} parent=0
    _
  %s4 = ssub.s32 1, %s2
  %s5 = scalar_select 0, %s4, %s2
  $region1: #{tpu_custom_call.1} parent=0
    #allocation2 [shape = 'u8[4096]{0}', space=vmem, size = 0x1000, scoped, tag = 'input window, operand 0, single buffered']
    #allocation3 [shape = 's32[1]{0}', space=sflag, size = 0x4, scoped, tag = 'scoped memory for tpu_custom_call.1']
    #allocation4 [shape = 's32[1]{0}', space=sflag, size = 0x4, scoped, tag = 'scoped memory for tpu_custom_call.1']
    #allocation5 [shape = 'u8[512]{0}', space=vmem, size = 0x400, scoped, tag = 'output window, operand 0, single buffered']
    %6 = vsyncpa [#allocation3], 0
    %7 = vsyncpa [#allocation4], 0
    // Predicated region
    $region2: #{tpu_custom_call.1} parent=1 // pred_check
      _
    $region3: #{tpu_custom_call.1} parent=1 // pred_check_branch
      %9 = sbr.rel (0) target = $region5
    $region4: #{tpu_custom_call.1} parent=1 // pred_region
      %11 = vsyncadd [#allocation3], 0
      %s13 = sshll.u32 %s0, 4
      %s14 = int_to_ptr.hbm [resolvable:$true] %s13
      %s15 = sshll.u32 [#allocation2], 4
      %s16 = int_to_ptr.vmem [resolvable:$true] %s15
      %18 = dma.hbm_to_vmem [thread:$0]  %s14, 128, %s16, [#allocation3]
    $region5: #{tpu_custom_call.1} parent=1 // pred_fallthru
      _
    // Predicated region
    $region6: #{tpu_custom_call.1} parent=1 // pred_check
      _
    $region7: #{tpu_custom_call.1} parent=1 // pred_check_branch
      %20 = sbr.rel (0) target = $region9
    $region8: #{tpu_custom_call.1} parent=1 // pred_region
      %22 = dma.done [#allocation3], 128
    $region9: #{tpu_custom_call.1} parent=1 // pred_fallthru
      _
    %v23 = vld [vmem:[#allocation2] sm:$0xff]
    %vm24 = vcmask 130048
    %v25 = vsel %vm24, %v23, -inf
    %26 = vmax.xlane.f32.xlu0 %v25
    %v27 = vpop.xlane.xlu0 %26
    %v28 = vsub.f32 %v23, %v27
    %v29 = vmul.f32 %v28, 1.442695
    %v30 = vpow.pop %v29
    %v31 = vsel %vm24, %v30, 0.0
    %32 = vadd.xlane.f32.xlu0 %v31
    %v33 = vpop.xlane.xlu0 %32
    %v34 = vrcp.pop %v33
    %v35 = vmul.f32 %v33, %v34
    %v36 = vsub.f32 1.0, %v35
    %v37 = vmul.f32 %v34, %v36
    %v38 = vadd.f32 %v34, %v37
    %vm39 = vweird.f32 %v33
    %vm40 = vweird.f32 %v34
    %vm41 = vmor %vm39, %vm40
    %v42 = vsel %vm41, %v34, %v38
    %v43 = vand.u32 2147483647, %v33
    %vm44 = vcmp.eq.f32.partialorder %v43, 8.507059e+37
    %v45 = vand.u32 %v33, 2147483648
    %v46 = vor.u32 1.1754944e-38, %v45
    %v47 = vsel %vm44, %v46, %v42
    %v48 = vmul.f32 %v30, %v47
    %v49 = vlog2.pop %v33
    %v50 = vmul.f32 %v49, 0.6931472
    %v51 = vsub.f32 %v28, %v50
    %v52 = vsub.f32 1.0, %v48
    %v53 = vmul.f32 %v52, %v52
    %v54 = vmul.f32 %v53, %v51
    %v55 = vsub.f32 0.0, %v54
    %v56 = vsel %vm24, %v55, 0.0
    %v57 = vrot.slane %v56, 4
    %v58 = vadd.f32 %v56, %v57
    %v59 = vrot.slane %v58, 2
    %v60 = vadd.f32 %v58, %v59
    %v61 = vrot.slane %v60, 1
    %v62 = vadd.f32 %v60, %v61
    %vm63 = vcmask 122880
    %64 = vst.msk [vmem:[#allocation5] sm:$0x1] %vm63, %v62
    // Predicated region
    $region10: #{tpu_custom_call.1} parent=1 // pred_check
      _
    $region11: #{tpu_custom_call.1} parent=1 // pred_check_branch
      %66 = sbr.rel (0) target = $region13
    $region12: #{tpu_custom_call.1} parent=1 // pred_region
      %68 = vsyncadd [#allocation4], 0
      %s70 = sshll.u32 [#allocation5], 4
      %s71 = int_to_ptr.vmem [resolvable:$true] %s70
      %s72 = sshll.u32 %s1, 4
      %s73 = int_to_ptr.hbm [resolvable:$true] %s72
      %75 = dma.vmem_to_hbm [thread:$0]  %s71, 16, %s73, [#allocation4]
    $region13: #{tpu_custom_call.1} parent=1 // pred_fallthru
      _
    // Predicated region
    $region14: #{tpu_custom_call.1} parent=1 // pred_check
      _
    $region15: #{tpu_custom_call.1} parent=1 // pred_check_branch
      %77 = sbr.rel (0) target = $region17
    $region16: #{tpu_custom_call.1} parent=1 // pred_region
      %79 = dma.done [#allocation4], 16
    $region17: #{tpu_custom_call.1} parent=1 // pred_fallthru
      _
    %80 = vsyncpa [#allocation3], 1
    %81 = vsyncpa [#allocation4], 1

</llo_original>
